<compile_context>
chip_gen: v6e
topology: v6e:2x2x1
jax: 0.10.0
libtpu: 0.0.40
codegen_flags: <defaults>
</compile_context>

<pallas_src>
import functools

import jax
import jax.numpy as jnp
from jax.experimental import pallas as pl
from jax.experimental.pallas import tpu as pltpu


def _round_up(x: int, m: int) -> int:
    return ((x + m - 1) // m) * m


def _dwconv1d_kernel(x_ref, halo_ref, w_ref, o_ref, win_ref, *, stride: int):
    """Depthwise 1-D conv for one (batch, time-tile, channel-tile) grid cell.

      x_ref    : (1, D, Ct)           main input window, D = T_TILE * stride
      halo_ref : (1, H, Ct)           right halo = first H rows of next window
      w_ref    : (K, mult, Ct)        taps x channel-multiplier x channels
      o_ref    : (mult, 1, T_TILE, Ct)
      win_ref  : (D + H, Ct) float32  VMEM scratch staging the full window
    """
    d = x_ref.shape[1]
    h = halo_ref.shape[1]
    ksize = w_ref.shape[0]
    mult = w_ref.shape[1]
    t_tile = o_ref.shape[2]

    # Stage the contiguous window once: single cast, no per-tap reload of the
    # raw (possibly bf16) input; halo handled with plain static slices.
    win_ref[0:d, :] = x_ref[0].astype(jnp.float32)
    win_ref[d:d + h, :] = halo_ref[0].astype(jnp.float32)

    for m in range(mult):                       # mult is small & static
        acc = None
        for k in range(ksize):                  # ksize is small & static -> unrolled
            if stride == 1:
                xk = win_ref[k:k + t_tile, :]
            else:
                xk = win_ref[pl.ds(k, t_tile, stride=stride), :]
            wk = w_ref[k, m, :].astype(jnp.float32)[None, :]
            term = xk * wk
            acc = term if acc is None else acc + term   # tap 0 initializes acc
        o_ref[m, 0, :, :] = acc.astype(o_ref.dtype)


def depthwise_conv1d(x, weight, bias=None, *, stride: int = 1, padding: int = 0):
    """Depthwise 1-D convolution matching nn.Conv1d(groups=in_channels).

    x:      (B, C_in, T)          PyTorch NCT layout
    weight: (C_out, 1, K)         PyTorch Conv1d weight, C_out = mult * C_in
    bias:   optional (C_out,)
    returns (B, C_out, T_out)
    """
    B, C_in, T = x.shape
    C_out, _, K = weight.shape
    assert C_out % C_in == 0, "out_channels must be a multiple of in_channels"
    mult = C_out // C_in

    T_out = (T + 2 * padding - K) // stride + 1
    assert T_out > 0, "invalid conv geometry"

    # ---- tiling -------------------------------------------------------------
    H = max(8, _round_up(K - 1, 8))                       # sublane-aligned halo rows
    t_tile_target = _round_up(max(8, 512 // stride), H)   # ~512 dense rows / tile
    T_TILE = min(t_tile_target, _round_up(T_out, H))      # multiple of H (and of 8)
    D = T_TILE * stride                                   # dense rows, multiple of H
    n_t = pl.cdiv(T_out, T_TILE)

    C_TILE = min(_round_up(C_in, 128), 512)               # lane-dense channel tile
    n_c = pl.cdiv(C_in, C_TILE)
    Cp = n_c * C_TILE

    halo_step = D // H                                    # halo block-index stride

    # ---- wrapper glue: one fused transpose+pad pass -------------------------
    T_total = n_t * D + H
    pad_r = T_total - padding - T                         # provably >= padding >= 0
    x_ntc = jnp.transpose(x, (0, 2, 1))                   # (B, T, C_in)
    x_p = jnp.pad(x_ntc, ((0, 0), (padding, pad_r), (0, Cp - C_in)))

    # weight (C_out, 1, K) -> (K, mult, Cp): w[k, m, c] = weight[c*mult + m, 0, k]
    w_kmc = jnp.transpose(weight.reshape(C_in, mult, K), (2, 1, 0))
    w_kmc = jnp.pad(w_kmc, ((0, 0), (0, 0), (0, Cp - C_in)))

    kernel = functools.partial(_dwconv1d_kernel, stride=stride)

    out = pl.pallas_call(
        kernel,
        out_shape=jax.ShapeDtypeStruct((mult, B, n_t * T_TILE, Cp), x.dtype),
        grid_spec=pltpu.PrefetchScalarGridSpec(
            num_scalar_prefetch=0,
            grid=(B, n_t, n_c),
            in_specs=[
                # main window: rows [t*D, (t+1)*D)
                pl.BlockSpec((1, D, C_TILE), lambda b, t, c: (b, t, c)),
                # right halo: rows [(t+1)*D, (t+1)*D + H) of the same array
                pl.BlockSpec((1, H, C_TILE),
                             lambda b, t, c: (b, (t + 1) * halo_step, c)),
                pl.BlockSpec((K, mult, C_TILE), lambda b, t, c: (0, 0, c)),
            ],
            out_specs=pl.BlockSpec((mult, 1, T_TILE, C_TILE),
                                   lambda b, t, c: (0, b, t, c)),
            scratch_shapes=[pltpu.VMEM((D + H, C_TILE), jnp.float32)],
        ),
        compiler_params=pltpu.CompilerParams(
            dimension_semantics=("parallel", "parallel", "parallel"),
            vmem_limit_bytes=32 * 1024 * 1024,   # well under v7x's 64 MiB VMEM
        ),
        cost_estimate=pl.CostEstimate(
            flops=2 * B * T_out * C_in * mult * K,
            transcendentals=0,
            bytes_accessed=(x_p.size * x_p.dtype.itemsize
                            + w_kmc.size * w_kmc.dtype.itemsize
                            + mult * B * n_t * T_TILE * Cp * x.dtype.itemsize),
        ),
    )(x_p, x_p, w_kmc)

    # (mult, B, Tp, Cp) -> (B, C_in, mult, T_out) -> (B, C_out, T_out)
    out = out[:, :, :T_out, :C_in]
    out = jnp.transpose(out, (1, 3, 0, 2)).reshape(B, C_out, T_out)
    if bias is not None:
        out = out + bias.astype(out.dtype)[None, :, None]
    return out


def _reference_conv(x, weight, *, stride, padding):
    """Pure-JAX reference: grouped conv identical to nn.Conv1d(groups=C_in)."""
    C_in = x.shape[1]
    return jax.lax.conv_general_dilated(
        x, weight,
        window_strides=(stride,),
        padding=[(padding, padding)],
        dimension_numbers=("NCH", "OIH", "NCH"),
        feature_group_count=C_in,
    )


def _check(name, out, ref, atol, rtol):
    out32 = out.astype(jnp.float32)
    ref32 = ref.astype(jnp.float32)
    assert out.shape == ref.shape, (name, out.shape, ref.shape)
    err = float(jnp.max(jnp.abs(out32 - ref32)))
    assert jnp.allclose(out32, ref32, atol=atol, rtol=rtol), (name, err)


if __name__ == "__main__":
    key = jax.random.PRNGKey(0)
    k1, k2, k3, k4, k5, k6, k7 = jax.random.split(key, 7)

    # Case 1: channel multiplier 2, stride 1, "same" padding (f32).
    B, C_in, T, mult, K, stride, padding = 2, 4, 16, 2, 3, 1, 1
    C_out = mult * C_in
    x = jax.random.normal(k1, (B, C_in, T), dtype=jnp.float32)
    w = jax.random.normal(k2, (C_out, 1, K), dtype=jnp.float32) * 0.1
    out = jax.block_until_ready(depthwise_conv1d(x, w, stride=stride, padding=padding))
    ref = _reference_conv(x, w, stride=stride, padding=padding)
    _check("case1", out, ref, 1e-4, 1e-4)

    # Case 2: stride 2, kernel 5, with bias (f32).
    B, C_in, T, mult, K, stride, padding = 2, 8, 37, 1, 5, 2, 2
    C_out = mult * C_in
    x = jax.random.normal(k3, (B, C_in, T), dtype=jnp.float32)
    w = jax.random.normal(k4, (C_out, 1, K), dtype=jnp.float32) * 0.1
    b = jax.random.normal(k5, (C_out,), dtype=jnp.float32) * 0.1
    out = jax.block_until_ready(
        depthwise_conv1d(x, w, b, stride=stride, padding=padding))
    ref = _reference_conv(x, w, stride=stride, padding=padding) + b[None, :, None]
    _check("case2", out, ref, 1e-4, 1e-4)

    # Case 3: bf16 inputs, multiplier 2, stride 1.
    B, C_in, T, mult, K, stride, padding = 2, 16, 40, 2, 3, 1, 1
    C_out = mult * C_in
    x = jax.random.normal(k6, (B, C_in, T), dtype=jnp.bfloat16)
    w = (jax.random.normal(k7, (C_out, 1, K), dtype=jnp.float32) * 0.1).astype(jnp.bfloat16)
    out = jax.block_until_ready(depthwise_conv1d(x, w, stride=stride, padding=padding))
    ref = _reference_conv(x.astype(jnp.float32), w.astype(jnp.float32),
                          stride=stride, padding=padding)
    _check("case3", out, ref, 2e-2, 2e-2)

    print("KERNEL_OK")
</pallas_src>

<mosaic_0001>
module attributes {stable_mosaic.version = 11 : i64} {
  func.func @_dwconv1d_kernel(%arg0: i32, %arg1: i32, %arg2: i32, %arg3: memref<1x16x128xf32, #tpu.memory_space<vmem>>, %arg4: memref<1x8x128xf32, #tpu.memory_space<vmem>>, %arg5: memref<3x2x128xf32, #tpu.memory_space<vmem>>, %arg6: memref<2x1x16x128xf32, #tpu.memory_space<vmem>>, %arg7: memref<24x128xf32, #tpu.memory_space<vmem>>) attributes {dimension_semantics = [#tpu.dimension_semantics<parallel>, #tpu.dimension_semantics<parallel>, #tpu.dimension_semantics<parallel>], iteration_bounds = array<i64: 2, 1, 1>, scalar_prefetch = 0 : i64, scratch_operands = 1 : i64, tpu.core_type = #tpu.core_type<tc>, window_params = [{transform_indices = @transform_0, window_bounds = array<i64: 1, 16, 128>}, {transform_indices = @transform_1, window_bounds = array<i64: 1, 8, 128>}, {transform_indices = @transform_2, window_bounds = array<i64: 3, 2, 128>}, {transform_indices = @transform_3, window_bounds = array<i64: 2, 1, 16, 128>}]} {
    %c0 = arith.constant 0 : index
    %c0_0 = arith.constant 0 : index
    %c0_1 = arith.constant 0 : index
    %0 = vector.load %arg3[%c0, %c0_0, %c0_1] : memref<1x16x128xf32, #tpu.memory_space<vmem>>, vector<1x16x128xf32>
    %1 = vector.shape_cast %0 : vector<1x16x128xf32> to vector<16x128xf32>
    %c0_2 = arith.constant 0 : index
    %c0_3 = arith.constant 0 : index
    %2 = vector.load %arg7[%c0_2, %c0_3] : memref<24x128xf32, #tpu.memory_space<vmem>>, vector<16x128xf32>
    tpu.vector_store %arg7[%c0_2, %c0_3], %1 {strides = array<i32>} : memref<24x128xf32, #tpu.memory_space<vmem>>, vector<16x128xf32>,
    %c0_4 = arith.constant 0 : index
    %c0_5 = arith.constant 0 : index
    %c0_6 = arith.constant 0 : index
    %3 = vector.load %arg4[%c0_4, %c0_5, %c0_6] : memref<1x8x128xf32, #tpu.memory_space<vmem>>, vector<1x8x128xf32>
    %4 = vector.shape_cast %3 : vector<1x8x128xf32> to vector<8x128xf32>
    %c16 = arith.constant 16 : index
    %c0_7 = arith.constant 0 : index
    %5 = vector.load %arg7[%c16, %c0_7] : memref<24x128xf32, #tpu.memory_space<vmem>>, vector<8x128xf32>
    tpu.vector_store %arg7[%c16, %c0_7], %4 {strides = array<i32>} : memref<24x128xf32, #tpu.memory_space<vmem>>, vector<8x128xf32>,
    %c0_8 = arith.constant 0 : index
    %c0_9 = arith.constant 0 : index
    %6 = vector.load %arg7[%c0_8, %c0_9] : memref<24x128xf32, #tpu.memory_space<vmem>>, vector<16x128xf32>
    %c0_10 = arith.constant 0 : index
    %c0_11 = arith.constant 0 : index
    %c0_12 = arith.constant 0 : index
    %7 = vector.load %arg5[%c0_10, %c0_11, %c0_12] : memref<3x2x128xf32, #tpu.memory_space<vmem>>, vector<1x1x128xf32>
    %8 = vector.shape_cast %7 : vector<1x1x128xf32> to vector<128xf32>
    %9 = vector.shape_cast %8 : vector<128xf32> to vector<1x128xf32>
    %10 = vector.broadcast %9 : vector<1x128xf32> to vector<16x128xf32>
    %11 = arith.mulf %6, %10 : vector<16x128xf32>
    %c1 = arith.constant 1 : index
    %c0_13 = arith.constant 0 : index
    %12 = vector.load %arg7[%c1, %c0_13] : memref<24x128xf32, #tpu.memory_space<vmem>>, vector<16x128xf32>
    %c1_14 = arith.constant 1 : index
    %c0_15 = arith.constant 0 : index
    %c0_16 = arith.constant 0 : index
    %13 = vector.load %arg5[%c1_14, %c0_15, %c0_16] : memref<3x2x128xf32, #tpu.memory_space<vmem>>, vector<1x1x128xf32>
    %14 = vector.shape_cast %13 : vector<1x1x128xf32> to vector<128xf32>
    %15 = vector.shape_cast %14 : vector<128xf32> to vector<1x128xf32>
    %16 = vector.broadcast %15 : vector<1x128xf32> to vector<16x128xf32>
    %17 = arith.mulf %12, %16 : vector<16x128xf32>
    %18 = arith.addf %11, %17 : vector<16x128xf32>
    %c2 = arith.constant 2 : index
    %c0_17 = arith.constant 0 : index
    %19 = vector.load %arg7[%c2, %c0_17] : memref<24x128xf32, #tpu.memory_space<vmem>>, vector<16x128xf32>
    %c2_18 = arith.constant 2 : index
    %c0_19 = arith.constant 0 : index
    %c0_20 = arith.constant 0 : index
    %20 = vector.load %arg5[%c2_18, %c0_19, %c0_20] : memref<3x2x128xf32, #tpu.memory_space<vmem>>, vector<1x1x128xf32>
    %21 = vector.shape_cast %20 : vector<1x1x128xf32> to vector<128xf32>
    %22 = vector.shape_cast %21 : vector<128xf32> to vector<1x128xf32>
    %23 = vector.broadcast %22 : vector<1x128xf32> to vector<16x128xf32>
    %24 = arith.mulf %19, %23 : vector<16x128xf32>
    %25 = arith.addf %18, %24 : vector<16x128xf32>
    %c0_21 = arith.constant 0 : index
    %c0_22 = arith.constant 0 : index
    %c0_23 = arith.constant 0 : index
    %c0_24 = arith.constant 0 : index
    %26 = vector.load %arg6[%c0_21, %c0_22, %c0_23, %c0_24] : memref<2x1x16x128xf32, #tpu.memory_space<vmem>>, vector<1x1x16x128xf32>
    %27 = vector.shape_cast %26 : vector<1x1x16x128xf32> to vector<16x128xf32>
    %28 = vector.shape_cast %25 : vector<16x128xf32> to vector<1x1x16x128xf32>
    tpu.vector_store %arg6[%c0_21, %c0_22, %c0_23, %c0_24], %28 {strides = array<i32>} : memref<2x1x16x128xf32, #tpu.memory_space<vmem>>, vector<1x1x16x128xf32>,
    %c0_25 = arith.constant 0 : index
    %c0_26 = arith.constant 0 : index
    %29 = vector.load %arg7[%c0_25, %c0_26] : memref<24x128xf32, #tpu.memory_space<vmem>>, vector<16x128xf32>
    %c0_27 = arith.constant 0 : index
    %c1_28 = arith.constant 1 : index
    %c0_29 = arith.constant 0 : index
    %30 = vector.load %arg5[%c0_27, %c1_28, %c0_29] : memref<3x2x128xf32, #tpu.memory_space<vmem>>, vector<1x1x128xf32>
    %31 = vector.shape_cast %30 : vector<1x1x128xf32> to vector<128xf32>
    %32 = vector.shape_cast %31 : vector<128xf32> to vector<1x128xf32>
    %33 = vector.broadcast %32 : vector<1x128xf32> to vector<16x128xf32>
    %34 = arith.mulf %29, %33 : vector<16x128xf32>
    %c1_30 = arith.constant 1 : index
    %c0_31 = arith.constant 0 : index
    %35 = vector.load %arg7[%c1_30, %c0_31] : memref<24x128xf32, #tpu.memory_space<vmem>>, vector<16x128xf32>
    %c1_32 = arith.constant 1 : index
    %c1_33 = arith.constant 1 : index
    %c0_34 = arith.constant 0 : index
    %36 = vector.load %arg5[%c1_32, %c1_33, %c0_34] : memref<3x2x128xf32, #tpu.memory_space<vmem>>, vector<1x1x128xf32>
    %37 = vector.shape_cast %36 : vector<1x1x128xf32> to vector<128xf32>
    %38 = vector.shape_cast %37 : vector<128xf32> to vector<1x128xf32>
    %39 = vector.broadcast %38 : vector<1x128xf32> to vector<16x128xf32>
    %40 = arith.mulf %35, %39 : vector<16x128xf32>
    %41 = arith.addf %34, %40 : vector<16x128xf32>
    %c2_35 = arith.constant 2 : index
    %c0_36 = arith.constant 0 : index
    %42 = vector.load %arg7[%c2_35, %c0_36] : memref<24x128xf32, #tpu.memory_space<vmem>>, vector<16x128xf32>
    %c2_37 = arith.constant 2 : index
    %c1_38 = arith.constant 1 : index
    %c0_39 = arith.constant 0 : index
    %43 = vector.load %arg5[%c2_37, %c1_38, %c0_39] : memref<3x2x128xf32, #tpu.memory_space<vmem>>, vector<1x1x128xf32>
    %44 = vector.shape_cast %43 : vector<1x1x128xf32> to vector<128xf32>
    %45 = vector.shape_cast %44 : vector<128xf32> to vector<1x128xf32>
    %46 = vector.broadcast %45 : vector<1x128xf32> to vector<16x128xf32>
    %47 = arith.mulf %42, %46 : vector<16x128xf32>
    %48 = arith.addf %41, %47 : vector<16x128xf32>
    %c1_40 = arith.constant 1 : index
    %c0_41 = arith.constant 0 : index
    %c0_42 = arith.constant 0 : index
    %c0_43 = arith.constant 0 : index
    %49 = vector.load %arg6[%c1_40, %c0_41, %c0_42, %c0_43] : memref<2x1x16x128xf32, #tpu.memory_space<vmem>>, vector<1x1x16x128xf32>
    %50 = vector.shape_cast %49 : vector<1x1x16x128xf32> to vector<16x128xf32>
    %51 = vector.shape_cast %48 : vector<16x128xf32> to vector<1x1x16x128xf32>
    tpu.vector_store %arg6[%c1_40, %c0_41, %c0_42, %c0_43], %51 {strides = array<i32>} : memref<2x1x16x128xf32, #tpu.memory_space<vmem>>, vector<1x1x16x128xf32>,
    return
  }
  func.func @transform_0(%arg0: i32, %arg1: i32, %arg2: i32) -> (i32, i32, i32) {
    %c0_i32 = arith.constant 0 : i32
    return %arg0, %arg1, %arg2 : i32, i32, i32
  }
  func.func @transform_1(%arg0: i32, %arg1: i32, %arg2: i32) -> (i32, i32, i32) {
    %c1_i32 = arith.constant 1 : i32
    %0 = arith.addi %arg1, %c1_i32 : i32
    %c2_i32 = arith.constant 2 : i32
    %1 = arith.muli %0, %c2_i32 : i32
    %c0_i32 = arith.constant 0 : i32
    return %arg0, %1, %arg2 : i32, i32, i32
  }
  func.func @transform_2(%arg0: i32, %arg1: i32, %arg2: i32) -> (i32, i32, i32) {
    %c0_i32 = arith.constant 0 : i32
    %c0_i32_0 = arith.constant 0 : i32
    %c0_i32_1 = arith.constant 0 : i32
    return %c0_i32, %c0_i32_0, %arg2 : i32, i32, i32
  }
  func.func @transform_3(%arg0: i32, %arg1: i32, %arg2: i32) -> (i32, i32, i32, i32) {
    %c0_i32 = arith.constant 0 : i32
    %c0_i32_0 = arith.constant 0 : i32
    return %c0_i32, %arg0, %arg1, %arg2 : i32, i32, i32, i32
  }
}

</mosaic_0001>

<llo_original>
// kernel: tpu_custom_call.1
$region0: #{tpu_custom_call.1}
  #allocation0 [shape = 'u32[]', space=smem, size = 0x4, offset = 0x4, fixed_abs, tag = 'smem constant byte address 0x4 - core index']
  #allocation1 [shape = 'u32[144,128]{1,0:T(1,128)}', space=vmem, size = 0x12000, scoped, tag = 'internal scratch']
  #allocation2 [shape = 'f32[24,128]{1,0:T(8,128)}', space=vmem, size = 0x3000, scoped, tag = 'scratch operand']
  #allocation10 [shape = 's32[]', space=sflag, size = 0x4, offset = 0, fixed_abs, tag = 'sflag constant byte address 0x0 - dummy sync flag']
  %s0 = inlined_call_operand.hbm [shape: f32[2,24,128], index: 0, kind: input, shape index: {}]
  %s1 = inlined_call_operand.hbm [shape: f32[2,24,128], index: 1, kind: input, shape index: {}]
  %s2 = inlined_call_operand.hbm [shape: f32[3,2,128], index: 2, kind: input, shape index: {}]
  %s3 = inlined_call_operand.hbm [shape: f32[2,2,16,128], index: 3, kind: output, shape index: {}]
  %s4 = sld [smem:[#allocation0]]
  $region57: #{tpu_custom_call.1} parent=0
    _
  %s6 = ssub.s32 1, %s4
  %s7 = scalar_select 0, %s6, %s4
  $region1: #{tpu_custom_call.1} parent=0
    #allocation3 [shape = 'u8[16384]{0}', space=vmem, size = 0x4000, scoped, tag = 'input window, operand 0']
    #allocation4 [shape = 's32[2]{0}', space=sflag, size = 0x8, scoped, tag = 'scoped memory for tpu_custom_call.1']
    #allocation5 [shape = 's32[2]{0}', space=sflag, size = 0x8, scoped, tag = 'scoped memory for tpu_custom_call.1']
    #allocation6 [shape = 'u8[8192]{0}', space=vmem, size = 0x2000, scoped, tag = 'input window, operand 1']
    #allocation7 [shape = 's32[2]{0}', space=sflag, size = 0x8, scoped, tag = 'scoped memory for tpu_custom_call.1']
    #allocation8 [shape = 'u8[3072]{0}', space=vmem, size = 0xc00, scoped, tag = 'input window, operand 2, single buffered']
    #allocation9 [shape = 'u8[32768]{0}', space=vmem, size = 0x8000, scoped, tag = 'output window, operand 0']
    %8 = vsyncpa [#allocation4], 0
    %s9 = scalar_lea.sflag [#allocation4], 1
    %10 = vsyncpa %s9, 0
    %11 = vsyncpa [#allocation7], 0
    %s12 = scalar_lea.sflag [#allocation7], 1
    %13 = vsyncpa %s12, 0
    %14 = vsyncpa [#allocation5], 0
    %s15 = scalar_lea.sflag [#allocation5], 1
    %16 = vsyncpa %s15, 0
    loop: start=0, step=1, limit=4
    $region2: #{tpu_custom_call.1} parent=1 // loop_pre_header
      _
    $region3: #{tpu_custom_call.1} parent=1 // loop_header
      %s18 = sphi 0, %s22
      %p19 = scmp.ge.s32.totalorder %s18, 4
      %s25 = sphi 0, %s44
      %s26 = sphi 0, %s40
      %s27 = sphi 0, %s36
      %s28 = sphi 0, %s25
      %s29 = sphi 0, %s26
      %s30 = sphi 0, %s27
      %s31 = sphi 0, %s28
      %s32 = sphi 0, %s29
      %s33 = sphi 0, %s30
      %s51 = sphi 0, %s53
      %s54 = sphi 0, %s51
      %s55 = sphi 0, %s54
      %s71 = sphi 0, %s55
      %s85 = sphi 0, %s87
      %s88 = sphi 0, %s85
      %s89 = sphi 0, %s88
      %s105 = sphi 0, %s89
      %s111 = sphi 0, %s113
      %s114 = sphi 0, %s111
      %s115 = sphi 0, %s114
      %s131 = sphi 0, %s115
      %s141 = sphi 0, %s143
      %s144 = sphi 0, %s141
      %s145 = sphi 0, %s144
      %s161 = sphi 0, %s145
    $region4: #{tpu_custom_call.1} parent=1 // loop_header_branch
      %21 = sbr.rel (%p19) target = $region8
    $region5: #{tpu_custom_call.1} parent=1 // loop_body
      %s23 = ssub.s32 %s18, 1
      %s24 = ssub.s32 %s18, 2
      %s34 = sadd.s32 1, %s27
      %p35 = scmp.ge.s32.totalorder %s34, 1
      %s36 = scalar_select %p35, 0, %s34
      %s37 = sadd.s32 1, %s26
      %s38 = scalar_select %p35, %s37, %s26
      %p39 = scmp.ge.s32.totalorder %s38, 1
      %s40 = scalar_select %p39, 0, %s38
      %s41 = sadd.s32 1, %s25
      %s42 = scalar_select %p39, %s41, %s25
      %p43 = scmp.ge.s32.totalorder %s42, 2
      %s44 = scalar_select %p43, 0, %s42
      %s45 = ssub.s32 %s25, %s44
      %s46 = ssub.s32 %s26, %s40
      %s47 = sor.u32 %s45, %s46
      %s48 = ssub.s32 %s27, %s36
      %s49 = sor.u32 %s47, %s48
      %p50 = scmp.eq.s32.totalorder %s49, 0
      %s52 = sadd.s32 %s51, 1
      %s53 = scalar_select %p50, %s51, %s52
      %p56 = pneg %p50
      %p57 = scmp.eq.s32.totalorder %s18, 1
      %p58 = por %p56, %p57
      %p59 = scmp.ne.s32.totalorder %s51, %s54
      %p60 = scmp.eq.s32.totalorder %s18, 0
      %p61 = por %p59, %p60
      %p62 = scmp.ne.s32.totalorder %s51, %s54
      %p63 = scmp.eq.s32.totalorder %s23, 1
      %p64 = por %p62, %p63
      %p65 = scmp.ne.s32.totalorder %s54, %s55
      %p66 = scmp.eq.s32.totalorder %s23, 0
      %p67 = por %p65, %p66
      %p68 = scmp.ne.s32.totalorder %s54, %s55
      %p69 = scmp.eq.s32.totalorder %s24, 1
      %p70 = por %p68, %p69
      %p72 = scmp.ne.s32.totalorder %s55, %s71
      %p73 = scmp.eq.s32.totalorder %s24, 0
      %p74 = por %p72, %p73
      %s75 = sadd.s32 %s26, 1
      %s76 = smul.u32 %s75, 2
      %s77 = sadd.s32 %s40, 1
      %s78 = smul.u32 %s77, 2
      %s79 = ssub.s32 %s25, %s44
      %s80 = ssub.s32 %s76, %s78
      %s81 = sor.u32 %s79, %s80
      %s82 = ssub.s32 %s27, %s36
      %s83 = sor.u32 %s81, %s82
      %p84 = scmp.eq.s32.totalorder %s83, 0
      %s86 = sadd.s32 %s85, 1
      %s87 = scalar_select %p84, %s85, %s86
      %p90 = pneg %p84
      %p91 = scmp.eq.s32.totalorder %s18, 1
      %p92 = por %p90, %p91
      %p93 = scmp.ne.s32.totalorder %s85, %s88
      %p94 = scmp.eq.s32.totalorder %s18, 0
      %p95 = por %p93, %p94
      %p96 = scmp.ne.s32.totalorder %s85, %s88
      %p97 = scmp.eq.s32.totalorder %s23, 1
      %p98 = por %p96, %p97
      %p99 = scmp.ne.s32.totalorder %s88, %s89
      %p100 = scmp.eq.s32.totalorder %s23, 0
      %p101 = por %p99, %p100
      %p102 = scmp.ne.s32.totalorder %s88, %s89
      %p103 = scmp.eq.s32.totalorder %s24, 1
      %p104 = por %p102, %p103
      %p106 = scmp.ne.s32.totalorder %s89, %s105
      %p107 = scmp.eq.s32.totalorder %s24, 0
      %p108 = por %p106, %p107
      %s109 = ssub.s32 %s27, %s36
      %p110 = scmp.eq.s32.totalorder %s109, 0
      %s112 = sadd.s32 %s111, 1
      %s113 = scalar_select %p110, %s111, %s112
      %p116 = pneg %p110
      %p117 = scmp.eq.s32.totalorder %s18, 1
      %p118 = por %p116, %p117
      %p119 = scmp.ne.s32.totalorder %s111, %s114
      %p120 = scmp.eq.s32.totalorder %s18, 0
      %p121 = por %p119, %p120
      %p122 = scmp.ne.s32.totalorder %s111, %s114
      %p123 = scmp.eq.s32.totalorder %s23, 1
      %p124 = por %p122, %p123
      %p125 = scmp.ne.s32.totalorder %s114, %s115
      %p126 = scmp.eq.s32.totalorder %s23, 0
      %p127 = por %p125, %p126
      %p128 = scmp.ne.s32.totalorder %s114, %s115
      %p129 = scmp.eq.s32.totalorder %s24, 1
      %p130 = por %p128, %p129
      %p132 = scmp.ne.s32.totalorder %s115, %s131
      %p133 = scmp.eq.s32.totalorder %s24, 0
      %p134 = por %p132, %p133
      %s135 = ssub.s32 %s25, %s44
      %s136 = ssub.s32 %s26, %s40
      %s137 = sor.u32 %s135, %s136
      %s138 = ssub.s32 %s27, %s36
      %s139 = sor.u32 %s137, %s138
      %p140 = scmp.eq.s32.totalorder %s139, 0
      %s142 = sadd.s32 %s141, 1
      %s143 = scalar_select %p140, %s141, %s142
      %p146 = pneg %p140
      %p147 = scmp.eq.s32.totalorder %s18, 1
      %p148 = por %p146, %p147
      %p149 = scmp.ne.s32.totalorder %s141, %s144
      %p150 = scmp.eq.s32.totalorder %s18, 0
      %p151 = por %p149, %p150
      %p152 = scmp.ne.s32.totalorder %s141, %s144
      %p153 = scmp.eq.s32.totalorder %s23, 1
      %p154 = por %p152, %p153
      %p155 = scmp.ne.s32.totalorder %s144, %s145
      %p156 = scmp.eq.s32.totalorder %s23, 0
      %p157 = por %p155, %p156
      %p158 = scmp.ne.s32.totalorder %s144, %s145
      %p159 = scmp.eq.s32.totalorder %s24, 1
      %p160 = por %p158, %p159
      %p162 = scmp.ne.s32.totalorder %s145, %s161
      %p163 = scmp.eq.s32.totalorder %s24, 0
      %p164 = por %p162, %p163
      %p165 = scmp.le.s32.totalorder 1, %s18
      %p166 = scmp.lt.s32.totalorder %s18, 3
      %p167 = pnand %p165, %p166
      %p168 = pneg %p167
      // Predicated region
      $region9: #{tpu_custom_call.1} parent=5 // pred_check
        _
      $region10: #{tpu_custom_call.1} parent=5 // pred_check_branch
        %170 = sbr.rel (%p167) target = $region12
      $region11: #{tpu_custom_call.1} parent=5 // pred_region
        %s171 = ssub.s32 %s18, 1
        // Predicated region
        $region13: #{tpu_custom_call.1} parent=11 // pred_check
          %p172 = pneg %p127
        $region14: #{tpu_custom_call.1} parent=11 // pred_check_branch
          %174 = sbr.rel (%p172) target = $region16
        $region15: #{tpu_custom_call.1} parent=11 // pred_region
          %s176 = ssub.s32 96, 96
          %177 = vsyncadd [#allocation7], %s176
          %s178 = smul.addr %s30, 32
          %s179 = scalar_lea.hbm %s2, %s178
          %s180 = sshll.u32 [#allocation8], 4
          %s181 = int_to_ptr.vmem [resolvable:$true] %s180
          %186 = dma.hbm_to_vmem [thread:$0]  %s179, 96, %s181, [#allocation7], 32, 32, 2
        $region16: #{tpu_custom_call.1} parent=11 // pred_fallthru
          _
      $region12: #{tpu_custom_call.1} parent=5 // pred_fallthru
        _
      %p187 = scmp.lt.s32.totalorder %s18, 2
      // Predicated region
      $region17: #{tpu_custom_call.1} parent=5 // pred_check
        %p188 = pneg %p187
      $region18: #{tpu_custom_call.1} parent=5 // pred_check_branch
        %190 = sbr.rel (%p188) target = $region20
      $region19: #{tpu_custom_call.1} parent=5 // pred_region
        // Predicated region
        $region21: #{tpu_custom_call.1} parent=19 // pred_check
          %p191 = pneg %p61
        $region22: #{tpu_custom_call.1} parent=19 // pred_check_branch
          %193 = sbr.rel (%p191) target = $region24
        $region23: #{tpu_custom_call.1} parent=19 // pred_region
          %s194 = sand.u32 %s51, 1
          %s195 = scalar_lea.sflag [#allocation4], %s194
          %s196 = sand.u32 %s51, 1
          %s197 = smul.addr %s196, 16
          %s198 = scalar_lea.vmem [#allocation3], %s197
          %s199 = smul.u32 2, %s26
          %s200 = ssub.s32 3, %s199
          %p201 = scmp.lt.s32.totalorder %s200, 2
          %s202 = scalar_select %p201, %s200, 2
          %s203 = smul.u32 128, %s202
          %s205 = ssub.s32 256, %s203
          %206 = vsyncadd %s195, %s205
          %p207 = scmp.ne.s32.totalorder 0, %s203
          %s208 = sadd.s32 %s27, %s199
          %s209 = smul.addr %s25, 3
          %s210 = sadd.s32 %s208, %s209
          %s211 = smul.addr %s210, 128
          %s212 = scalar_lea.hbm %s0, %s211
          %s213 = smul.u32 8, %s202
          %s214 = sshll.u32 %s198, 4
          %s215 = int_to_ptr.vmem [resolvable:$true] %s214
          %s216 = sshll.u32 %s213, 4
          %220 = dma.hbm_to_vmem [thread:$0]  (%p207), %s212, %s216, %s215, %s195, 128, 128, 8
        $region24: #{tpu_custom_call.1} parent=19 // pred_fallthru
          _
        // Predicated region
        $region25: #{tpu_custom_call.1} parent=19 // pred_check
          %p221 = pneg %p95
        $region26: #{tpu_custom_call.1} parent=19 // pred_check_branch
          %223 = sbr.rel (%p221) target = $region28
        $region27: #{tpu_custom_call.1} parent=19 // pred_region
          %s224 = sand.u32 %s18, 1
          %s225 = scalar_lea.sflag [#allocation7], %s224
          %s226 = sand.u32 %s85, 1
          %s227 = smul.addr %s226, 8
          %s228 = scalar_lea.vmem [#allocation6], %s227
          %s229 = sadd.s32 %s26, 1
          %s230 = smul.u32 %s229, 2
          %s232 = ssub.s32 128, 128
          %233 = vsyncadd %s225, %s232
          %s234 = sadd.s32 %s27, %s230
          %s235 = smul.addr %s25, 3
          %s236 = sadd.s32 %s234, %s235
          %s237 = smul.addr %s236, 128
          %s238 = scalar_lea.hbm %s1, %s237
          %s240 = sshll.u32 %s228, 4
          %s241 = int_to_ptr.vmem [resolvable:$true] %s240
          %243 = dma.hbm_to_vmem [thread:$0]  %s238, 128, %s241, %s225
        $region28: #{tpu_custom_call.1} parent=19 // pred_fallthru
          _
      $region20: #{tpu_custom_call.1} parent=5 // pred_fallthru
        _
      %p244 = scmp.le.s32.totalorder 1, %s18
      %p245 = scmp.lt.s32.totalorder %s18, 3
      %p246 = pnand %p244, %p245
      %p247 = pneg %p246
      // Predicated region
      $region29: #{tpu_custom_call.1} parent=5 // pred_check
        _
      $region30: #{tpu_custom_call.1} parent=5 // pred_check_branch
        %249 = sbr.rel (%p246) target = $region32
      $region31: #{tpu_custom_call.1} parent=5 // pred_region
        %s250 = ssub.s32 %s18, 1
        %s251 = sand.u32 %s54, 1
        %s252 = scalar_lea.sflag [#allocation4], %s251
        %s253 = sand.u32 %s54, 1
        %s254 = smul.addr %s253, 16
        %s255 = scalar_lea.vmem [#allocation3], %s254
        // Predicated region
        $region33: #{tpu_custom_call.1} parent=31 // pred_check
          %p256 = pneg %p67
        $region34: #{tpu_custom_call.1} parent=31 // pred_check_branch
          %258 = sbr.rel (%p256) target = $region36
        $region35: #{tpu_custom_call.1} parent=31 // pred_region
          %259 = dma.done %s252, 256
        $region36: #{tpu_custom_call.1} parent=31 // pred_fallthru
          _
        %s260 = sand.u32 %s23, 1
        %s261 = scalar_lea.sflag [#allocation7], %s260
        %s262 = sand.u32 %s88, 1
        %s263 = smul.addr %s262, 8
        %s264 = scalar_lea.vmem [#allocation6], %s263
        // Predicated region
        $region37: #{tpu_custom_call.1} parent=31 // pred_check
          %p265 = pneg %p101
        $region38: #{tpu_custom_call.1} parent=31 // pred_check_branch
          %267 = sbr.rel (%p265) target = $region40
        $region39: #{tpu_custom_call.1} parent=31 // pred_region
          %268 = dma.done %s261, 128
        $region40: #{tpu_custom_call.1} parent=31 // pred_fallthru
          _
        // Predicated region
        $region41: #{tpu_custom_call.1} parent=31 // pred_check
          %p269 = pneg %p127
        $region42: #{tpu_custom_call.1} parent=31 // pred_check_branch
          %271 = sbr.rel (%p269) target = $region44
        $region43: #{tpu_custom_call.1} parent=31 // pred_region
          %272 = dma.done [#allocation7], 96
        $region44: #{tpu_custom_call.1} parent=31 // pred_fallthru
          _
        %s273 = sand.u32 %s54, 1
        %s274 = scalar_lea.sflag [#allocation4], %s273
        %s275 = sand.u32 %s54, 1
        %s276 = smul.addr %s275, 16
        %s277 = scalar_lea.vmem [#allocation3], %s276
        %p278 = pneg %p67
        %p279 = pneg %p64
        %s280 = sand.u32 %s23, 1
        %s281 = scalar_lea.sflag [#allocation7], %s280
        %s282 = sand.u32 %s88, 1
        %s283 = smul.addr %s282, 8
        %s284 = scalar_lea.vmem [#allocation6], %s283
        %p285 = pneg %p101
        %p286 = pneg %p98
        %p287 = pneg %p127
        %p288 = pneg %p124
        %p289 = pneg %p157
        %p290 = pneg %p154
        %s291 = sand.u32 %s144, 1
        %s292 = scalar_lea.sflag [#allocation5], %s291
        %s293 = sand.u32 %s144, 1
        %s294 = smul.addr %s293, 32
        %s295 = scalar_lea.vmem [#allocation9], %s294
        %s296 = smul.u32 2, %s29
        %s297 = ssub.s32 3, %s296
        %p298 = scmp.lt.s32.totalorder %s297, 2
        %s299 = scalar_select %p298, %s297, 2
        %s300 = smul.u32 128, %s299
        %s301 = sadd.s32 %s29, 1
        %s302 = smul.u32 %s301, 2
        %s303 = smul.u32 2, %s29
        %v304 = vld [vmem:[%s255] sm:$0xff]
        %v305 = vld [vmem:[%s255 + $0x8] sm:$0xff]
        %306 = vst [vmem:[#allocation2] sm:$0xff] %v304
        %307 = vst [vmem:[#allocation2 + $0x8] sm:$0xff] %v305
        %v308 = vld [vmem:[%s264] sm:$0xff]
        %309 = vst [vmem:[#allocation2 + $0x10] sm:$0xff] %v308
        %v310 = vld [vmem:[#allocation2] sm:$0xff]
        %v311 = vld [vmem:[#allocation2 + $0x8] sm:$0xff]
        %v312 = vld [vmem:[#allocation8] sm:$0x1]
        %v313 = vlaneseq
        %v314 = vshrl.u32 %v313, 7
        %v315 = vsub.s32 0, %v314
        %v316 = vrot.slane %v312, %v315
        %v317 = vmul.f32 %v310, %v316
        %v318 = vmul.f32 %v311, %v316
        %v319 = vld [vmem:[#allocation2 + $0x1] sm:$0xff]
        %v320 = vld [vmem:[#allocation2 + $0x9] sm:$0xff]
        %s321 = scalar_lea.vmem [#allocation8], 2
        %v322 = vld [vmem:[%s321] sm:$0x1]
        %v323 = vlaneseq
        %v324 = vshrl.u32 %v323, 7
        %v325 = vsub.s32 0, %v324
        %v326 = vrot.slane %v322, %v325
        %v327 = vmul.f32 %v319, %v326
        %v328 = vmul.f32 %v320, %v326
        %v329 = vadd.f32 %v317, %v327
        %v330 = vadd.f32 %v318, %v328
        %v331 = vld [vmem:[#allocation2 + $0x2] sm:$0xff]
        %v332 = vld [vmem:[#allocation2 + $0xa] sm:$0xff]
        %s333 = scalar_lea.vmem [#allocation8], 4
        %v334 = vld [vmem:[%s333] sm:$0x1]
        %v335 = vlaneseq
        %v336 = vshrl.u32 %v335, 7
        %v337 = vsub.s32 0, %v336
        %v338 = vrot.slane %v334, %v337
        %v339 = vmul.f32 %v331, %v338
        %v340 = vmul.f32 %v332, %v338
        %v341 = vadd.f32 %v329, %v339
        %v342 = vadd.f32 %v330, %v340
        %343 = vst [vmem:[%s295] sm:$0xff] %v341
        %344 = vst [vmem:[%s295 + $0x8] sm:$0xff] %v342
        %v345 = vld [vmem:[#allocation2] sm:$0xff]
        %v346 = vld [vmem:[#allocation2 + $0x8] sm:$0xff]
        %v347 = vld [vmem:[#allocation8 + $0x1] sm:$0x1]
        %v348 = vlaneseq
        %v349 = vshrl.u32 %v348, 7
        %v350 = vsub.s32 0, %v349
        %v351 = vrot.slane %v347, %v350
        %v352 = vmul.f32 %v345, %v351
        %v353 = vmul.f32 %v346, %v351
        %v354 = vld [vmem:[#allocation2 + $0x1] sm:$0xff]
        %v355 = vld [vmem:[#allocation2 + $0x9] sm:$0xff]
        %v356 = vld [vmem:[%s321 + $0x1] sm:$0x1]
        %v357 = vlaneseq
        %v358 = vshrl.u32 %v357, 7
        %v359 = vsub.s32 0, %v358
        %v360 = vrot.slane %v356, %v359
        %v361 = vmul.f32 %v354, %v360
        %v362 = vmul.f32 %v355, %v360
        %v363 = vadd.f32 %v352, %v361
        %v364 = vadd.f32 %v353, %v362
        %v365 = vld [vmem:[#allocation2 + $0x2] sm:$0xff]
        %v366 = vld [vmem:[#allocation2 + $0xa] sm:$0xff]
        %v367 = vld [vmem:[%s333 + $0x1] sm:$0x1]
        %v368 = vlaneseq
        %v369 = vshrl.u32 %v368, 7
        %v370 = vsub.s32 0, %v369
        %v371 = vrot.slane %v367, %v370
        %v372 = vmul.f32 %v365, %v371
        %v373 = vmul.f32 %v366, %v371
        %v374 = vadd.f32 %v363, %v372
        %v375 = vadd.f32 %v364, %v373
        %s376 = scalar_lea.vmem %s295, 16 [#allocation9]
        %377 = vst [vmem:[%s376] sm:$0xff] %v374
        %378 = vst [vmem:[%s376 + $0x8] sm:$0xff] %v375
        %s379 = sand.u32 %s144, 1
        %s380 = scalar_lea.sflag [#allocation5], %s379
        %s381 = sand.u32 %s144, 1
        %s382 = smul.addr %s381, 32
        %s383 = scalar_lea.vmem [#allocation9], %s382
        // Predicated region
        $region45: #{tpu_custom_call.1} parent=31 // pred_check
          %p384 = pneg %p154
        $region46: #{tpu_custom_call.1} parent=31 // pred_check_branch
          %386 = sbr.rel (%p384) target = $region48
        $region47: #{tpu_custom_call.1} parent=31 // pred_region
          #allocation11 [shape = 'u32[6]{0}', space=smem, size = 0x18, scoped, tag = 'DMA stride descriptor']
          %s387 = smul.u32 2, %s29
          %s389 = ssub.s32 512, 512
          %390 = vsyncadd %s380, %s389
          %s391 = sadd.s32 %s30, %s387
          %s392 = smul.addr %s28, 2
          %s393 = sadd.s32 %s391, %s392
          %s394 = smul.addr %s393, 128
          %s395 = scalar_lea.hbm %s3, %s394
          %s397 = sshll.u32 1, 14
          %s398 = sxor.u32 4294967295, %s397
          %s401 = sshll.u32 7, 18
          %s402 = sxor.u32 4294967295, %s401
          %s403 = sand.u32 0, %s402
          %s405 = sor.u32 %s403, 0
          %s406 = sshll.u32 %s383, 4
          %s407 = int_to_ptr.vmem [resolvable:$true] %s406
          %413 = sst [smem:[#allocation11]] 256
          %s414 = scalar_lea.smem [#allocation11], 1
          %415 = sst [smem:[%s414]] 512
          %s416 = scalar_lea.smem [#allocation11], 2
          %417 = sst [smem:[%s416]] 2
          %s418 = scalar_lea.smem [#allocation11], 3
          %419 = sst [smem:[%s418]] 128
          %s420 = scalar_lea.smem [#allocation11], 4
          %421 = sst [smem:[%s420]] 128
          %s422 = scalar_lea.smem [#allocation11], 5
          %423 = sst [smem:[%s422]] 8
          %425 = dma.general %s407, 512, %s395, %s380, 131072, [#allocation11], %s405, 0
        $region48: #{tpu_custom_call.1} parent=31 // pred_fallthru
          _
      $region32: #{tpu_custom_call.1} parent=5 // pred_fallthru
        _
      %p426 = scmp.le.s32.totalorder 2, %s18
      // Predicated region
      $region49: #{tpu_custom_call.1} parent=5 // pred_check
        %p427 = pneg %p426
      $region50: #{tpu_custom_call.1} parent=5 // pred_check_branch
        %429 = sbr.rel (%p427) target = $region52
      $region51: #{tpu_custom_call.1} parent=5 // pred_region
        %s430 = ssub.s32 %s18, 2
        // Predicated region
        $region53: #{tpu_custom_call.1} parent=51 // pred_check
          %p431 = pneg %p160
        $region54: #{tpu_custom_call.1} parent=51 // pred_check_branch
          %433 = sbr.rel (%p431) target = $region56
        $region55: #{tpu_custom_call.1} parent=51 // pred_region
          %s434 = sand.u32 %s145, 1
          %s435 = scalar_lea.sflag [#allocation5], %s434
          %s436 = sand.u32 %s145, 1
          %s437 = smul.addr %s436, 32
          %s438 = scalar_lea.vmem [#allocation9], %s437
          %439 = dma.done %s435, 512
        $region56: #{tpu_custom_call.1} parent=51 // pred_fallthru
          _
      $region52: #{tpu_custom_call.1} parent=5 // pred_fallthru
        _
    $region6: #{tpu_custom_call.1} parent=1 // loop_footer
      %s22 = sadd.s32 1, %s18
    $region7: #{tpu_custom_call.1} parent=1 // loop_footer_branch
      %17 = sbr.rel target = $region3
    $region8: #{tpu_custom_call.1} parent=1 // loop_exit
      _
    %440 = vsyncpa [#allocation4], 1
    %s441 = scalar_lea.sflag [#allocation4], 1
    %442 = vsyncpa %s441, 1
    %443 = vsyncpa [#allocation7], 1
    %s444 = scalar_lea.sflag [#allocation7], 1
    %445 = vsyncpa %s444, 1
    %446 = vsyncpa [#allocation5], 1
    %s447 = scalar_lea.sflag [#allocation5], 1
    %448 = vsyncpa %s447, 1

</llo_original>
